<compile_context>
chip_gen: v7x
topology: tpu7x:2x2x1
jax: 0.10.0
libtpu: 0.0.40
codegen_flags: <defaults>
</compile_context>

<pallas_src>
import jax
import jax.numpy as jnp
from jax.experimental import pallas as pl
from jax.experimental.pallas import tpu as pltpu

# ----- model dims (small, consistent with a tiny BERT) ----------------------
B = 2          # batch
S = 8          # sequence length (includes CLS at 0 and SEP at -1)
D = 32         # hidden size
F = 64         # FFN inner size
V = 64         # vocab size
BS = B * S
W3 = 3 * D     # fused QKV width (also >= F, used as packed-slab width)
LN_EPS = 1e-5


def _layernorm(x, gamma, beta):
    mu = jnp.mean(x, axis=-1, keepdims=True)
    var = jnp.mean((x - mu) * (x - mu), axis=-1, keepdims=True)
    return (x - mu) * jax.lax.rsqrt(var + LN_EPS) * gamma + beta


def _gelu_tanh(x):
    # tanh-approximate GELU (EUP-friendly; avoids erf lowering issues)
    c = 0.7978845608028654  # sqrt(2/pi)
    return 0.5 * x * (1.0 + jnp.tanh(c * (x + 0.044715 * x * x * x)))


def encoder_kernel(ids_ref, emb_ref, pos_ref, wqkv_ref, wo_ref,
                   w1_ref, w2_ref, small_ref, out_ref):
    # ---- unpack the small-parameter slab (one vreg) -------------------------
    sm = small_ref[...]                      # (8, W3) f32
    bqkv = sm[0:1, :]                        # (1, 3D)
    b1   = sm[1:2, 0:F]                      # (1, F)
    bo   = sm[2:3, 0:D]                      # (1, D)
    b2   = sm[3:4, 0:D]
    ln1g = sm[4:5, 0:D]
    ln1b = sm[5:6, 0:D]
    ln2g = sm[6:7, 0:D]
    ln2b = sm[7:8, 0:D]

    # ---- embedding lookup as one-hot MXU matmul + position add -------------
    ids = ids_ref[...]                                           # (BS, 1) int32
    iota = jax.lax.broadcasted_iota(jnp.int32, (BS, V), 1)        # (BS, V)
    onehot = (iota == ids).astype(jnp.float32)                    # (BS, V)
    x = jnp.dot(onehot, emb_ref[...],
                preferred_element_type=jnp.float32)               # (BS, D)
    pos = pos_ref[...]                                            # (S, D)
    x = x + jnp.concatenate([pos] * B, axis=0)                    # (BS, D)

    # ---- fused QKV projection -----------------------------------------------
    qkv = jnp.dot(x, wqkv_ref[...],
                  preferred_element_type=jnp.float32) + bqkv      # (BS, 3D)
    q = qkv[:, 0:D]
    k = qkv[:, D:2 * D]
    v = qkv[:, 2 * D:3 * D]

    # ---- single-head self-attention (per batch element, static unroll) -----
    scale = 1.0 / float(D) ** 0.5
    contract_last = (((1,), (1,)), ((), ()))      # qd,kd->qk (no transpose)
    ctx = []
    for b in range(B):
        lo, hi = b * S, (b + 1) * S
        qb, kb, vb = q[lo:hi, :], k[lo:hi, :], v[lo:hi, :]
        s = jax.lax.dot_general(qb, kb, contract_last,
                                preferred_element_type=jnp.float32) * scale
        s = s - jnp.max(s, axis=-1, keepdims=True)
        p = jnp.exp(s)
        p = p * pl.reciprocal(jnp.sum(p, axis=-1, keepdims=True), approx=True)
        ctx.append(jnp.dot(p, vb, preferred_element_type=jnp.float32))
    attn = jnp.concatenate(ctx, axis=0)                           # (BS, D)
    attn = jnp.dot(attn, wo_ref[...],
                   preferred_element_type=jnp.float32) + bo

    # ---- residual + LayerNorm 1 ---------------------------------------------
    h1 = _layernorm(x + attn, ln1g, ln1b)

    # ---- feed-forward --------------------------------------------------------
    f = jnp.dot(h1, w1_ref[...], preferred_element_type=jnp.float32) + b1
    f = _gelu_tanh(f)
    f = jnp.dot(f, w2_ref[...], preferred_element_type=jnp.float32) + b2

    # ---- residual + LayerNorm 2 ---------------------------------------------
    h2 = _layernorm(h1 + f, ln2g, ln2b)                           # (BS, D)

    # aligned full-slab store; the [:, 1:-1] drop happens in the wrapper
    out_ref[...] = h2.astype(out_ref.dtype)


def _full_vmem_spec(shape):
    zero = (0,) * len(shape)
    return pl.BlockSpec(shape, lambda i, _zero=zero: _zero)


def token_embedding_forward(input_ids, params):
    """input_ids: (B, S) int32 -> (B, S-2, D) float32 ('bert_out')."""
    ids = input_ids.reshape(BS, 1).astype(jnp.int32)
    args = [ids, params["tok_emb"], params["pos_emb"], params["wqkv"],
            params["wo"], params["w1"], params["w2"], params["small"]]

    flat = pl.pallas_call(
        encoder_kernel,
        out_shape=jax.ShapeDtypeStruct((BS, D), jnp.float32),
        grid=(1,),
        in_specs=[_full_vmem_spec(a.shape) for a in args],
        out_specs=pl.BlockSpec((BS, D), lambda i: (0, 0)),
        compiler_params=pltpu.CompilerParams(
            dimension_semantics=("arbitrary",)),
    )(*args)

    # TokenEmbeddingModel.forward: last_hidden_state[:, 1:-1]
    return flat.reshape(B, S, D)[:, 1:-1, :]


def _pad_row(v, width):
    v = v.reshape(1, -1)
    return jnp.pad(v, ((0, 0), (0, width - v.shape[1])))


def init_params(key):
    ks = jax.random.split(key, 20)
    s = 0.02
    p = {
        "tok_emb": s * jax.random.normal(ks[0], (V, D), jnp.float32),
        "pos_emb": s * jax.random.normal(ks[1], (S, D), jnp.float32),
        "wq": s * jax.random.normal(ks[2], (D, D), jnp.float32),
        "bq": s * jax.random.normal(ks[3], (1, D), jnp.float32),
        "wk": s * jax.random.normal(ks[4], (D, D), jnp.float32),
        "bk": s * jax.random.normal(ks[5], (1, D), jnp.float32),
        "wv": s * jax.random.normal(ks[6], (D, D), jnp.float32),
        "bv": s * jax.random.normal(ks[7], (1, D), jnp.float32),
        "wo": s * jax.random.normal(ks[8], (D, D), jnp.float32),
        "bo": s * jax.random.normal(ks[9], (1, D), jnp.float32),
        "w1": s * jax.random.normal(ks[10], (D, F), jnp.float32),
        "b1": s * jax.random.normal(ks[11], (1, F), jnp.float32),
        "w2": s * jax.random.normal(ks[12], (F, D), jnp.float32),
        "b2": s * jax.random.normal(ks[13], (1, D), jnp.float32),
        "ln1_g": 1.0 + 0.1 * jax.random.normal(ks[14], (1, D), jnp.float32),
        "ln1_b": 0.1 * jax.random.normal(ks[15], (1, D), jnp.float32),
        "ln2_g": 1.0 + 0.1 * jax.random.normal(ks[16], (1, D), jnp.float32),
        "ln2_b": 0.1 * jax.random.normal(ks[17], (1, D), jnp.float32),
    }
    # fused QKV weight / bias
    p["wqkv"] = jnp.concatenate([p["wq"], p["wk"], p["wv"]], axis=1)   # (D, 3D)
    bqkv = jnp.concatenate([p["bq"], p["bk"], p["bv"]], axis=1)        # (1, 3D)
    # pack the 12 tiny bias / LN vectors into a single (8, 3D) slab
    p["small"] = jnp.concatenate([
        _pad_row(bqkv, W3), _pad_row(p["b1"], W3),
        _pad_row(p["bo"], W3), _pad_row(p["b2"], W3),
        _pad_row(p["ln1_g"], W3), _pad_row(p["ln1_b"], W3),
        _pad_row(p["ln2_g"], W3), _pad_row(p["ln2_b"], W3),
    ], axis=0)                                                         # (8, 3D)
    return p


def reference_forward(input_ids, p):
    """Plain-JAX reference of the same synthetic encoder (for validation)."""
    hp = jax.lax.Precision.HIGHEST
    x = p["tok_emb"][input_ids] + p["pos_emb"][None]                   # (B,S,D)
    q = jnp.einsum("bsd,de->bse", x, p["wq"], precision=hp) + p["bq"]
    k = jnp.einsum("bsd,de->bse", x, p["wk"], precision=hp) + p["bk"]
    v = jnp.einsum("bsd,de->bse", x, p["wv"], precision=hp) + p["bv"]
    s = jnp.einsum("bqd,bkd->bqk", q, k, precision=hp) / jnp.sqrt(float(D))
    a = jax.nn.softmax(s, axis=-1)
    attn = jnp.einsum("bqk,bkd->bqd", a, v, precision=hp)
    attn = jnp.einsum("bsd,de->bse", attn, p["wo"], precision=hp) + p["bo"]
    h1 = _layernorm(x + attn, p["ln1_g"], p["ln1_b"])
    f = jnp.einsum("bsd,df->bsf", h1, p["w1"], precision=hp) + p["b1"]
    f = _gelu_tanh(f)
    f = jnp.einsum("bsf,fd->bsd", f, p["w2"], precision=hp) + p["b2"]
    h2 = _layernorm(h1 + f, p["ln2_g"], p["ln2_b"])
    return h2[:, 1:-1, :]


if __name__ == "__main__":
    key = jax.random.PRNGKey(0)
    pkey, dkey = jax.random.split(key)
    params = init_params(pkey)

    # deterministic token ids; position 0 ~ [CLS], position -1 ~ [SEP]
    input_ids = jax.random.randint(dkey, (B, S), 0, V, dtype=jnp.int32)

    bert_out = token_embedding_forward(input_ids, params)
    bert_out = jax.block_until_ready(bert_out)

    assert bert_out.shape == (B, S - 2, D), bert_out.shape
    assert bool(jnp.all(jnp.isfinite(bert_out)))

    ref = reference_forward(input_ids, params)
    assert bool(jnp.allclose(bert_out, ref, atol=2e-2, rtol=2e-2)), (
        float(jnp.max(jnp.abs(bert_out - ref))))

    print("KERNEL_OK")
</pallas_src>

<mosaic_0001>
module attributes {stable_mosaic.version = 11 : i64} {
  func.func @encoder_kernel(%arg0: i32, %arg1: memref<16x1xi32, #tpu.memory_space<vmem>>, %arg2: memref<64x32xf32, #tpu.memory_space<vmem>>, %arg3: memref<8x32xf32, #tpu.memory_space<vmem>>, %arg4: memref<32x96xf32, #tpu.memory_space<vmem>>, %arg5: memref<32x32xf32, #tpu.memory_space<vmem>>, %arg6: memref<32x64xf32, #tpu.memory_space<vmem>>, %arg7: memref<64x32xf32, #tpu.memory_space<vmem>>, %arg8: memref<8x96xf32, #tpu.memory_space<vmem>>, %arg9: memref<16x32xf32, #tpu.memory_space<vmem>>) attributes {dimension_semantics = [#tpu.dimension_semantics<arbitrary>], iteration_bounds = array<i64: 1>, scalar_prefetch = 0 : i64, scratch_operands = 0 : i64, tpu.core_type = #tpu.core_type<tc>, window_params = [{pipeline_mode = #tpu.pipeline_mode<synchronous>, transform_indices = @transform_0, window_bounds = array<i64: 16, 1>}, {pipeline_mode = #tpu.pipeline_mode<synchronous>, transform_indices = @transform_1, window_bounds = array<i64: 64, 32>}, {pipeline_mode = #tpu.pipeline_mode<synchronous>, transform_indices = @transform_2, window_bounds = array<i64: 8, 32>}, {pipeline_mode = #tpu.pipeline_mode<synchronous>, transform_indices = @transform_3, window_bounds = array<i64: 32, 96>}, {pipeline_mode = #tpu.pipeline_mode<synchronous>, transform_indices = @transform_4, window_bounds = array<i64: 32, 32>}, {pipeline_mode = #tpu.pipeline_mode<synchronous>, transform_indices = @transform_5, window_bounds = array<i64: 32, 64>}, {pipeline_mode = #tpu.pipeline_mode<synchronous>, transform_indices = @transform_6, window_bounds = array<i64: 64, 32>}, {pipeline_mode = #tpu.pipeline_mode<synchronous>, transform_indices = @transform_7, window_bounds = array<i64: 8, 96>}, {pipeline_mode = #tpu.pipeline_mode<synchronous>, transform_indices = @transform_8, window_bounds = array<i64: 16, 32>}]} {
    %c0 = arith.constant 0 : index
    %c0_0 = arith.constant 0 : index
    %0 = vector.load %arg8[%c0, %c0_0] : memref<8x96xf32, #tpu.memory_space<vmem>>, vector<8x96xf32>
    %1 = vector.extract_strided_slice %0 {offsets = [0, 0], sizes = [1, 96], strides = [1, 1]} : vector<8x96xf32> to vector<1x96xf32>
    %2 = vector.extract_strided_slice %0 {offsets = [1, 0], sizes = [1, 64], strides = [1, 1]} : vector<8x96xf32> to vector<1x64xf32>
    %3 = vector.extract_strided_slice %0 {offsets = [2, 0], sizes = [1, 32], strides = [1, 1]} : vector<8x96xf32> to vector<1x32xf32>
    %4 = vector.extract_strided_slice %0 {offsets = [3, 0], sizes = [1, 32], strides = [1, 1]} : vector<8x96xf32> to vector<1x32xf32>
    %5 = vector.extract_strided_slice %0 {offsets = [4, 0], sizes = [1, 32], strides = [1, 1]} : vector<8x96xf32> to vector<1x32xf32>
    %6 = vector.extract_strided_slice %0 {offsets = [5, 0], sizes = [1, 32], strides = [1, 1]} : vector<8x96xf32> to vector<1x32xf32>
    %7 = vector.extract_strided_slice %0 {offsets = [6, 0], sizes = [1, 32], strides = [1, 1]} : vector<8x96xf32> to vector<1x32xf32>
    %8 = vector.extract_strided_slice %0 {offsets = [7, 0], sizes = [1, 32], strides = [1, 1]} : vector<8x96xf32> to vector<1x32xf32>
    %c0_1 = arith.constant 0 : index
    %c0_2 = arith.constant 0 : index
    %9 = vector.load %arg1[%c0_1, %c0_2] : memref<16x1xi32, #tpu.memory_space<vmem>>, vector<16x1xi32>
    %10 = tpu.iota {dimensions = array<i32: 1>} : vector<16x64xi32>
    %11 = vector.broadcast %9 : vector<16x1xi32> to vector<16x64xi32>
    %12 = arith.cmpi eq, %10, %11 : vector<16x64xi32>
    %13 = arith.extui %12 : vector<16x64xi1> to vector<16x64xi32>
    %14 = arith.sitofp %13 : vector<16x64xi32> to vector<16x64xf32>
    %c0_3 = arith.constant 0 : index
    %c0_4 = arith.constant 0 : index
    %15 = vector.load %arg2[%c0_3, %c0_4] : memref<64x32xf32, #tpu.memory_space<vmem>>, vector<64x32xf32>
    %cst = arith.constant dense<0.000000e+00> : vector<16x32xf32>
    %16 = tpu.matmul %14, %15, %cst {dimension_numbers = #tpu.dot_dimension_numbers<[1], [0], [0], [1], [0, 0, 1, 1], [], []>} : vector<16x64xf32>, vector<64x32xf32>, vector<16x32xf32> -> vector<16x32xf32>
    %c0_5 = arith.constant 0 : index
    %c0_6 = arith.constant 0 : index
    %17 = vector.load %arg3[%c0_5, %c0_6] : memref<8x32xf32, #tpu.memory_space<vmem>>, vector<8x32xf32>
    %18 = tpu.concatenate %17, %17 in 0 : vector<8x32xf32>, vector<8x32xf32> -> vector<16x32xf32>
    %19 = arith.addf %16, %18 : vector<16x32xf32>
    %c0_7 = arith.constant 0 : index
    %c0_8 = arith.constant 0 : index
    %20 = vector.load %arg4[%c0_7, %c0_8] : memref<32x96xf32, #tpu.memory_space<vmem>>, vector<32x96xf32>
    %cst_9 = arith.constant dense<0.000000e+00> : vector<16x96xf32>
    %21 = tpu.matmul %19, %20, %cst_9 {dimension_numbers = #tpu.dot_dimension_numbers<[1], [0], [0], [1], [0, 0, 1, 1], [], []>} : vector<16x32xf32>, vector<32x96xf32>, vector<16x96xf32> -> vector<16x96xf32>
    %22 = vector.broadcast %1 : vector<1x96xf32> to vector<16x96xf32>
    %23 = arith.addf %21, %22 : vector<16x96xf32>
    %24 = vector.extract_strided_slice %23 {offsets = [0, 0], sizes = [16, 32], strides = [1, 1]} : vector<16x96xf32> to vector<16x32xf32>
    %25 = vector.extract_strided_slice %23 {offsets = [0, 32], sizes = [16, 32], strides = [1, 1]} : vector<16x96xf32> to vector<16x32xf32>
    %26 = vector.extract_strided_slice %23 {offsets = [0, 64], sizes = [16, 32], strides = [1, 1]} : vector<16x96xf32> to vector<16x32xf32>
    %27 = vector.extract_strided_slice %24 {offsets = [0, 0], sizes = [8, 32], strides = [1, 1]} : vector<16x32xf32> to vector<8x32xf32>
    %28 = vector.extract_strided_slice %25 {offsets = [0, 0], sizes = [8, 32], strides = [1, 1]} : vector<16x32xf32> to vector<8x32xf32>
    %29 = vector.extract_strided_slice %26 {offsets = [0, 0], sizes = [8, 32], strides = [1, 1]} : vector<16x32xf32> to vector<8x32xf32>
    %cst_10 = arith.constant dense<0.000000e+00> : vector<8x8xf32>
    %30 = tpu.matmul %27, %28, %cst_10 {dimension_numbers = #tpu.dot_dimension_numbers<[1], [1], [0], [0], [0, 0, 1, 0], [], []>} : vector<8x32xf32>, vector<8x32xf32>, vector<8x8xf32> -> vector<8x8xf32>
    %cst_11 = arith.constant 0.176776692 : f32
    %31 = vector.broadcast %cst_11 : f32 to vector<8x8xf32>
    %32 = arith.mulf %30, %31 : vector<8x8xf32>
    %cst_12 = arith.constant dense<0xFF800000> : vector<8xf32>
    %33 = vector.multi_reduction <maximumf>, %32, %cst_12 [1] : vector<8x8xf32> to vector<8xf32>
    %34 = vector.shape_cast %33 : vector<8xf32> to vector<8x1xf32>
    %35 = vector.broadcast %34 : vector<8x1xf32> to vector<8x8xf32>
    %36 = arith.subf %32, %35 : vector<8x8xf32>
    %37 = math.exp %36 : vector<8x8xf32>
    %cst_13 = arith.constant dense<0.000000e+00> : vector<8xf32>
    %38 = vector.multi_reduction <add>, %37, %cst_13 [1] : vector<8x8xf32> to vector<8xf32>
    %39 = vector.shape_cast %38 : vector<8xf32> to vector<8x1xf32>
    %40 = tpu.reciprocal %39 {approx = true} : vector<8x1xf32> -> vector<8x1xf32>
    %41 = vector.broadcast %40 : vector<8x1xf32> to vector<8x8xf32>
    %42 = arith.mulf %37, %41 : vector<8x8xf32>
    %cst_14 = arith.constant dense<0.000000e+00> : vector<8x32xf32>
    %43 = tpu.matmul %42, %29, %cst_14 {dimension_numbers = #tpu.dot_dimension_numbers<[1], [0], [0], [1], [0, 0, 1, 1], [], []>} : vector<8x8xf32>, vector<8x32xf32>, vector<8x32xf32> -> vector<8x32xf32>
    %44 = vector.extract_strided_slice %24 {offsets = [8, 0], sizes = [8, 32], strides = [1, 1]} : vector<16x32xf32> to vector<8x32xf32>
    %45 = vector.extract_strided_slice %25 {offsets = [8, 0], sizes = [8, 32], strides = [1, 1]} : vector<16x32xf32> to vector<8x32xf32>
    %46 = vector.extract_strided_slice %26 {offsets = [8, 0], sizes = [8, 32], strides = [1, 1]} : vector<16x32xf32> to vector<8x32xf32>
    %cst_15 = arith.constant dense<0.000000e+00> : vector<8x8xf32>
    %47 = tpu.matmul %44, %45, %cst_15 {dimension_numbers = #tpu.dot_dimension_numbers<[1], [1], [0], [0], [0, 0, 1, 0], [], []>} : vector<8x32xf32>, vector<8x32xf32>, vector<8x8xf32> -> vector<8x8xf32>
    %cst_16 = arith.constant 0.176776692 : f32
    %48 = vector.broadcast %cst_16 : f32 to vector<8x8xf32>
    %49 = arith.mulf %47, %48 : vector<8x8xf32>
    %cst_17 = arith.constant dense<0xFF800000> : vector<8xf32>
    %50 = vector.multi_reduction <maximumf>, %49, %cst_17 [1] : vector<8x8xf32> to vector<8xf32>
    %51 = vector.shape_cast %50 : vector<8xf32> to vector<8x1xf32>
    %52 = vector.broadcast %51 : vector<8x1xf32> to vector<8x8xf32>
    %53 = arith.subf %49, %52 : vector<8x8xf32>
    %54 = math.exp %53 : vector<8x8xf32>
    %cst_18 = arith.constant dense<0.000000e+00> : vector<8xf32>
    %55 = vector.multi_reduction <add>, %54, %cst_18 [1] : vector<8x8xf32> to vector<8xf32>
    %56 = vector.shape_cast %55 : vector<8xf32> to vector<8x1xf32>
    %57 = tpu.reciprocal %56 {approx = true} : vector<8x1xf32> -> vector<8x1xf32>
    %58 = vector.broadcast %57 : vector<8x1xf32> to vector<8x8xf32>
    %59 = arith.mulf %54, %58 : vector<8x8xf32>
    %cst_19 = arith.constant dense<0.000000e+00> : vector<8x32xf32>
    %60 = tpu.matmul %59, %46, %cst_19 {dimension_numbers = #tpu.dot_dimension_numbers<[1], [0], [0], [1], [0, 0, 1, 1], [], []>} : vector<8x8xf32>, vector<8x32xf32>, vector<8x32xf32> -> vector<8x32xf32>
    %61 = tpu.concatenate %43, %60 in 0 : vector<8x32xf32>, vector<8x32xf32> -> vector<16x32xf32>
    %c0_20 = arith.constant 0 : index
    %c0_21 = arith.constant 0 : index
    %62 = vector.load %arg5[%c0_20, %c0_21] : memref<32x32xf32, #tpu.memory_space<vmem>>, vector<32x32xf32>
    %cst_22 = arith.constant dense<0.000000e+00> : vector<16x32xf32>
    %63 = tpu.matmul %61, %62, %cst_22 {dimension_numbers = #tpu.dot_dimension_numbers<[1], [0], [0], [1], [0, 0, 1, 1], [], []>} : vector<16x32xf32>, vector<32x32xf32>, vector<16x32xf32> -> vector<16x32xf32>
    %64 = vector.broadcast %3 : vector<1x32xf32> to vector<16x32xf32>
    %65 = arith.addf %63, %64 : vector<16x32xf32>
    %66 = arith.addf %19, %65 : vector<16x32xf32>
    %cst_23 = arith.constant dense<0.000000e+00> : vector<16xf32>
    %67 = vector.multi_reduction <add>, %66, %cst_23 [1] : vector<16x32xf32> to vector<16xf32>
    %68 = vector.shape_cast %67 : vector<16xf32> to vector<16x1xf32>
    %cst_24 = arith.constant 3.200000e+01 : f32
    %69 = vector.broadcast %cst_24 : f32 to vector<16x1xf32>
    %70 = arith.divf %68, %69 : vector<16x1xf32>
    %71 = vector.broadcast %70 : vector<16x1xf32> to vector<16x32xf32>
    %72 = arith.subf %66, %71 : vector<16x32xf32>
    %73 = vector.broadcast %70 : vector<16x1xf32> to vector<16x32xf32>
    %74 = arith.subf %66, %73 : vector<16x32xf32>
    %75 = arith.mulf %72, %74 : vector<16x32xf32>
    %cst_25 = arith.constant dense<0.000000e+00> : vector<16xf32>
    %76 = vector.multi_reduction <add>, %75, %cst_25 [1] : vector<16x32xf32> to vector<16xf32>
    %77 = vector.shape_cast %76 : vector<16xf32> to vector<16x1xf32>
    %cst_26 = arith.constant 3.200000e+01 : f32
    %78 = vector.broadcast %cst_26 : f32 to vector<16x1xf32>
    %79 = arith.divf %77, %78 : vector<16x1xf32>
    %80 = vector.broadcast %70 : vector<16x1xf32> to vector<16x32xf32>
    %81 = arith.subf %66, %80 : vector<16x32xf32>
    %cst_27 = arith.constant 9.99999974E-6 : f32
    %82 = vector.broadcast %cst_27 : f32 to vector<16x1xf32>
    %83 = arith.addf %79, %82 : vector<16x1xf32>
    %84 = math.rsqrt %83 : vector<16x1xf32>
    %85 = vector.broadcast %84 : vector<16x1xf32> to vector<16x32xf32>
    %86 = arith.mulf %81, %85 : vector<16x32xf32>
    %87 = vector.broadcast %5 : vector<1x32xf32> to vector<16x32xf32>
    %88 = arith.mulf %86, %87 : vector<16x32xf32>
    %89 = vector.broadcast %6 : vector<1x32xf32> to vector<16x32xf32>
    %90 = arith.addf %88, %89 : vector<16x32xf32>
    %c0_28 = arith.constant 0 : index
    %c0_29 = arith.constant 0 : index
    %91 = vector.load %arg6[%c0_28, %c0_29] : memref<32x64xf32, #tpu.memory_space<vmem>>, vector<32x64xf32>
    %cst_30 = arith.constant dense<0.000000e+00> : vector<16x64xf32>
    %92 = tpu.matmul %90, %91, %cst_30 {dimension_numbers = #tpu.dot_dimension_numbers<[1], [0], [0], [1], [0, 0, 1, 1], [], []>} : vector<16x32xf32>, vector<32x64xf32>, vector<16x64xf32> -> vector<16x64xf32>
    %93 = vector.broadcast %2 : vector<1x64xf32> to vector<16x64xf32>
    %94 = arith.addf %92, %93 : vector<16x64xf32>
    %cst_31 = arith.constant 5.000000e-01 : f32
    %95 = vector.broadcast %cst_31 : f32 to vector<16x64xf32>
    %96 = arith.mulf %95, %94 : vector<16x64xf32>
    %cst_32 = arith.constant 4.471500e-02 : f32
    %97 = vector.broadcast %cst_32 : f32 to vector<16x64xf32>
    %98 = arith.mulf %97, %94 : vector<16x64xf32>
    %99 = arith.mulf %98, %94 : vector<16x64xf32>
    %100 = arith.mulf %99, %94 : vector<16x64xf32>
    %101 = arith.addf %94, %100 : vector<16x64xf32>
    %cst_33 = arith.constant 0.797884583 : f32
    %102 = vector.broadcast %cst_33 : f32 to vector<16x64xf32>
    %103 = arith.mulf %102, %101 : vector<16x64xf32>
    %104 = math.tanh %103 : vector<16x64xf32>
    %cst_34 = arith.constant 1.000000e+00 : f32
    %105 = vector.broadcast %cst_34 : f32 to vector<16x64xf32>
    %106 = arith.addf %105, %104 : vector<16x64xf32>
    %107 = arith.mulf %96, %106 : vector<16x64xf32>
    %c0_35 = arith.constant 0 : index
    %c0_36 = arith.constant 0 : index
    %108 = vector.load %arg7[%c0_35, %c0_36] : memref<64x32xf32, #tpu.memory_space<vmem>>, vector<64x32xf32>
    %cst_37 = arith.constant dense<0.000000e+00> : vector<16x32xf32>
    %109 = tpu.matmul %107, %108, %cst_37 {dimension_numbers = #tpu.dot_dimension_numbers<[1], [0], [0], [1], [0, 0, 1, 1], [], []>} : vector<16x64xf32>, vector<64x32xf32>, vector<16x32xf32> -> vector<16x32xf32>
    %110 = vector.broadcast %4 : vector<1x32xf32> to vector<16x32xf32>
    %111 = arith.addf %109, %110 : vector<16x32xf32>
    %112 = arith.addf %90, %111 : vector<16x32xf32>
    %cst_38 = arith.constant dense<0.000000e+00> : vector<16xf32>
    %113 = vector.multi_reduction <add>, %112, %cst_38 [1] : vector<16x32xf32> to vector<16xf32>
    %114 = vector.shape_cast %113 : vector<16xf32> to vector<16x1xf32>
    %cst_39 = arith.constant 3.200000e+01 : f32
    %115 = vector.broadcast %cst_39 : f32 to vector<16x1xf32>
    %116 = arith.divf %114, %115 : vector<16x1xf32>
    %117 = vector.broadcast %116 : vector<16x1xf32> to vector<16x32xf32>
    %118 = arith.subf %112, %117 : vector<16x32xf32>
    %119 = vector.broadcast %116 : vector<16x1xf32> to vector<16x32xf32>
    %120 = arith.subf %112, %119 : vector<16x32xf32>
    %121 = arith.mulf %118, %120 : vector<16x32xf32>
    %cst_40 = arith.constant dense<0.000000e+00> : vector<16xf32>
    %122 = vector.multi_reduction <add>, %121, %cst_40 [1] : vector<16x32xf32> to vector<16xf32>
    %123 = vector.shape_cast %122 : vector<16xf32> to vector<16x1xf32>
    %cst_41 = arith.constant 3.200000e+01 : f32
    %124 = vector.broadcast %cst_41 : f32 to vector<16x1xf32>
    %125 = arith.divf %123, %124 : vector<16x1xf32>
    %126 = vector.broadcast %116 : vector<16x1xf32> to vector<16x32xf32>
    %127 = arith.subf %112, %126 : vector<16x32xf32>
    %cst_42 = arith.constant 9.99999974E-6 : f32
    %128 = vector.broadcast %cst_42 : f32 to vector<16x1xf32>
    %129 = arith.addf %125, %128 : vector<16x1xf32>
    %130 = math.rsqrt %129 : vector<16x1xf32>
    %131 = vector.broadcast %130 : vector<16x1xf32> to vector<16x32xf32>
    %132 = arith.mulf %127, %131 : vector<16x32xf32>
    %133 = vector.broadcast %7 : vector<1x32xf32> to vector<16x32xf32>
    %134 = arith.mulf %132, %133 : vector<16x32xf32>
    %135 = vector.broadcast %8 : vector<1x32xf32> to vector<16x32xf32>
    %136 = arith.addf %134, %135 : vector<16x32xf32>
    %c0_43 = arith.constant 0 : index
    %c0_44 = arith.constant 0 : index
    %137 = vector.load %arg9[%c0_43, %c0_44] : memref<16x32xf32, #tpu.memory_space<vmem>>, vector<16x32xf32>
    tpu.vector_store %arg9[%c0_43, %c0_44], %136 {strides = array<i32>} : memref<16x32xf32, #tpu.memory_space<vmem>>, vector<16x32xf32>,
    return
  }
  func.func @transform_0(%arg0: i32) -> (i32, i32) {
    %c0_i32 = arith.constant 0 : i32
    %c0_i32_0 = arith.constant 0 : i32
    %c0_i32_1 = arith.constant 0 : i32
    return %c0_i32, %c0_i32_0 : i32, i32
  }
  func.func @transform_1(%arg0: i32) -> (i32, i32) {
    %c0_i32 = arith.constant 0 : i32
    %c0_i32_0 = arith.constant 0 : i32
    %c0_i32_1 = arith.constant 0 : i32
    return %c0_i32, %c0_i32_0 : i32, i32
  }
  func.func @transform_2(%arg0: i32) -> (i32, i32) {
    %c0_i32 = arith.constant 0 : i32
    %c0_i32_0 = arith.constant 0 : i32
    %c0_i32_1 = arith.constant 0 : i32
    return %c0_i32, %c0_i32_0 : i32, i32
  }
  func.func @transform_3(%arg0: i32) -> (i32, i32) {
    %c0_i32 = arith.constant 0 : i32
    %c0_i32_0 = arith.constant 0 : i32
    %c0_i32_1 = arith.constant 0 : i32
    return %c0_i32, %c0_i32_0 : i32, i32
  }
  func.func @transform_4(%arg0: i32) -> (i32, i32) {
    %c0_i32 = arith.constant 0 : i32
    %c0_i32_0 = arith.constant 0 : i32
    %c0_i32_1 = arith.constant 0 : i32
    return %c0_i32, %c0_i32_0 : i32, i32
  }
  func.func @transform_5(%arg0: i32) -> (i32, i32) {
    %c0_i32 = arith.constant 0 : i32
    %c0_i32_0 = arith.constant 0 : i32
    %c0_i32_1 = arith.constant 0 : i32
    return %c0_i32, %c0_i32_0 : i32, i32
  }
  func.func @transform_6(%arg0: i32) -> (i32, i32) {
    %c0_i32 = arith.constant 0 : i32
    %c0_i32_0 = arith.constant 0 : i32
    %c0_i32_1 = arith.constant 0 : i32
    return %c0_i32, %c0_i32_0 : i32, i32
  }
  func.func @transform_7(%arg0: i32) -> (i32, i32) {
    %c0_i32 = arith.constant 0 : i32
    %c0_i32_0 = arith.constant 0 : i32
    %c0_i32_1 = arith.constant 0 : i32
    return %c0_i32, %c0_i32_0 : i32, i32
  }
  func.func @transform_8(%arg0: i32) -> (i32, i32) {
    %c0_i32 = arith.constant 0 : i32
    %c0_i32_0 = arith.constant 0 : i32
    %c0_i32_1 = arith.constant 0 : i32
    return %c0_i32, %c0_i32_0 : i32, i32
  }
}

</mosaic_0001>

<llo_original>
// kernel: tpu_custom_call.1
$region0: #{tpu_custom_call.1}
  #allocation0 [shape = 'u32[]', space=smem, size = 0x4, offset = 0x4, fixed_abs, tag = 'smem constant byte address 0x4 - core index']
  #allocation1 [shape = 'u32[144,128]{1,0:T(1,128)}', space=vmem, size = 0x12000, scoped, tag = 'internal scratch']
  %s0 = inlined_call_operand.vmem [shape: s32[16,1], index: 0, kind: input, shape index: {}]
  %s1 = inlined_call_operand.vmem [shape: f32[64,32], index: 1, kind: input, shape index: {}]
  %s2 = inlined_call_operand.vmem [shape: f32[8,32], index: 2, kind: input, shape index: {}]
  %s3 = inlined_call_operand.vmem [shape: f32[32,96], index: 3, kind: input, shape index: {}]
  %s4 = inlined_call_operand.vmem [shape: f32[32,32], index: 4, kind: input, shape index: {}]
  %s5 = inlined_call_operand.vmem [shape: f32[32,64], index: 5, kind: input, shape index: {}]
  %s6 = inlined_call_operand.vmem [shape: f32[64,32], index: 6, kind: input, shape index: {}]
  %s7 = inlined_call_operand.vmem [shape: f32[8,96], index: 7, kind: input, shape index: {}]
  %s8 = inlined_call_operand.hbm [shape: f32[16,32], index: 8, kind: output, shape index: {}]
  %s9 = sld [smem:[#allocation0]]
  $region42: #{tpu_custom_call.1} parent=0
    _
  %s11 = ssub.s32 1, %s9
  %s12 = scalar_select 0, %s11, %s9
  $region1: #{tpu_custom_call.1} parent=0
    #allocation2 [shape = 'u8[8192]{0}', space=vmem, size = 0x2000, scoped, tag = 'output window, operand 0, single buffered']
    #allocation3 [shape = 's32[1]{0}', space=sflag, size = 0x4, scoped, tag = 'scoped memory for tpu_custom_call.1']
    %13 = vsyncpa [#allocation3], 0
    // Predicated region
    $region2: #{tpu_custom_call.1} parent=1 // pred_check
      _
    $region3: #{tpu_custom_call.1} parent=1 // pred_check_branch
      %15 = sbr.rel (0) target = $region5
    $region4: #{tpu_custom_call.1} parent=1 // pred_region
      _
    $region5: #{tpu_custom_call.1} parent=1 // pred_fallthru
      _
    // Predicated region
    $region6: #{tpu_custom_call.1} parent=1 // pred_check
      _
    $region7: #{tpu_custom_call.1} parent=1 // pred_check_branch
      %17 = sbr.rel (0) target = $region9
    $region8: #{tpu_custom_call.1} parent=1 // pred_region
      _
    $region9: #{tpu_custom_call.1} parent=1 // pred_fallthru
      _
    // Predicated region
    $region10: #{tpu_custom_call.1} parent=1 // pred_check
      _
    $region11: #{tpu_custom_call.1} parent=1 // pred_check_branch
      %19 = sbr.rel (0) target = $region13
    $region12: #{tpu_custom_call.1} parent=1 // pred_region
      _
    $region13: #{tpu_custom_call.1} parent=1 // pred_fallthru
      _
    // Predicated region
    $region14: #{tpu_custom_call.1} parent=1 // pred_check
      _
    $region15: #{tpu_custom_call.1} parent=1 // pred_check_branch
      %21 = sbr.rel (0) target = $region17
    $region16: #{tpu_custom_call.1} parent=1 // pred_region
      _
    $region17: #{tpu_custom_call.1} parent=1 // pred_fallthru
      _
    // Predicated region
    $region18: #{tpu_custom_call.1} parent=1 // pred_check
      _
    $region19: #{tpu_custom_call.1} parent=1 // pred_check_branch
      %23 = sbr.rel (0) target = $region21
    $region20: #{tpu_custom_call.1} parent=1 // pred_region
      _
    $region21: #{tpu_custom_call.1} parent=1 // pred_fallthru
      _
    // Predicated region
    $region22: #{tpu_custom_call.1} parent=1 // pred_check
      _
    $region23: #{tpu_custom_call.1} parent=1 // pred_check_branch
      %25 = sbr.rel (0) target = $region25
    $region24: #{tpu_custom_call.1} parent=1 // pred_region
      _
    $region25: #{tpu_custom_call.1} parent=1 // pred_fallthru
      _
    // Predicated region
    $region26: #{tpu_custom_call.1} parent=1 // pred_check
      _
    $region27: #{tpu_custom_call.1} parent=1 // pred_check_branch
      %27 = sbr.rel (0) target = $region29
    $region28: #{tpu_custom_call.1} parent=1 // pred_region
      _
    $region29: #{tpu_custom_call.1} parent=1 // pred_fallthru
      _
    // Predicated region
    $region30: #{tpu_custom_call.1} parent=1 // pred_check
      _
    $region31: #{tpu_custom_call.1} parent=1 // pred_check_branch
      %29 = sbr.rel (0) target = $region33
    $region32: #{tpu_custom_call.1} parent=1 // pred_region
      _
    $region33: #{tpu_custom_call.1} parent=1 // pred_fallthru
      _
    %v30 = vld [vmem:[%s7] sm:$0xff]
    %v31 = vld [vmem:[%s0] sm:$0xff]
    %v32 = vld [vmem:[%s0 + $0x8] sm:$0xff]
    %v33 = vlaneseq
    %v34 = vand.u32 %v33, 127
    %35 = vset.pattern.permute.xlu0 0
    %36 = vperm.xlu0 %35, %v31
    %v37 = vpop.permute.xlu0 %36
    %38 = vset.pattern.permute.xlu0 0
    %39 = vperm.xlu0 %38, %v32
    %v40 = vpop.permute.xlu0 %39
    %vm41 = vcmp.eq.s32.totalorder %v34, %v37
    %vm42 = vcmp.eq.s32.totalorder %v34, %v40
    %v43 = vsel %vm41, 1, 0
    %v44 = vsel %vm42, 1, 0
    %v45 = vcvt.s32.f32 %v43
    %v46 = vcvt.s32.f32 %v44
    %v47 = vld [vmem:[%s1] sm:$0xff]
    %v48 = vld [vmem:[%s1 + $0x8] sm:$0xff]
    %v49 = vld [vmem:[%s1 + $0x10] sm:$0xff]
    %v50 = vld [vmem:[%s1 + $0x18] sm:$0xff]
    %v51 = vld [vmem:[%s1 + $0x20] sm:$0xff]
    %v52 = vld [vmem:[%s1 + $0x28] sm:$0xff]
    %v53 = vld [vmem:[%s1 + $0x30] sm:$0xff]
    %v54 = vld [vmem:[%s1 + $0x38] sm:$0xff]
    %v55 = vld [vmem:[%s2] sm:$0xff]
    %vm56 = vcmask 523264
    %v58 = vsel %vm56, %v45, 0
    %v61 = vsel %vm56, %v46, 0
    %63 = vmatprep.subr.mxu0 0.0
    %64 = vmatpush1.msra.mxu0 %v47
    %65 = vmatprep.subr.mxu0 0.0
    %66 = vmatpush1.msra.mxu0 %v48
    %67 = vmatprep.subr.mxu0 0.0
    %68 = vmatpush1.msra.mxu0 %v49
    %69 = vmatprep.subr.mxu0 0.0
    %70 = vmatpush1.msra.mxu0 %v50
    %71 = vmatprep.subr.mxu0 0.0
    %72 = vmatpush1.msra.mxu0 %v51
    %73 = vmatprep.subr.mxu0 0.0
    %74 = vmatpush1.msra.mxu0 %v52
    %75 = vmatprep.subr.mxu0 0.0
    %76 = vmatpush1.msra.mxu0 %v53
    %77 = vmatprep.subr.mxu0 0.0
    %78 = vmatpush1.msra.mxu0 %v54
    %79 = vmatprep.subr.mxu0 0.0
    %80 = vmatpush1.msra.mxu0 0.0
    %81 = vmatprep.subr.mxu0 0.0
    %82 = vmatpush1.msra.mxu0 0.0
    %83 = vmatprep.subr.mxu0 0.0
    %84 = vmatpush1.msra.mxu0 0.0
    %85 = vmatprep.subr.mxu0 0.0
    %86 = vmatpush1.msra.mxu0 0.0
    %87 = vmatprep.subr.mxu0 0.0
    %88 = vmatpush1.msra.mxu0 0.0
    %89 = vmatprep.subr.mxu0 0.0
    %90 = vmatpush1.msra.mxu0 0.0
    %91 = vmatprep.subr.mxu0 0.0
    %92 = vmatpush1.msra.mxu0 0.0
    %93 = vmatprep.subr.mxu0 0.0
    %94 = vmatpush1.msra.mxu0 0.0
    %95 = vmatprep.subr.mxu0 0.0
    %96 = vmatpush1.msra.mxu0 0.0
    %97 = vmatprep.subr.mxu0 0.0
    %98 = vmatpush1.msra.mxu0 0.0
    %99 = vmatprep.subr.mxu0 0.0
    %100 = vmatpush1.msra.mxu0 0.0
    %101 = vmatprep.subr.mxu0 0.0
    %102 = vmatpush1.msra.mxu0 0.0
    %103 = vmatprep.subr.mxu0 0.0
    %104 = vmatpush1.msra.mxu0 0.0
    %105 = vmatprep.subr.mxu0 0.0
    %106 = vmatpush1.msra.mxu0 0.0
    %107 = vmatprep.subr.mxu0 0.0
    %108 = vmatpush1.msra.mxu0 0.0
    %109 = vmatprep.subr.mxu0 0.0
    %110 = vmatpush1.msra.mxu0 0.0
    %111 = vmatprep.subr.mxu0 0.0
    %112 = vmatpush1.msra.mxu0 0.0
    %113 = vmatprep.subr.mxu0 0.0
    %114 = vmatpush1.msra.mxu0 0.0
    %115 = vmatprep.subr.mxu0 0.0
    %116 = vmatpush1.msra.mxu0 0.0
    %117 = vmatprep.subr.mxu0 0.0
    %118 = vmatpush1.msra.mxu0 0.0
    %119 = vmatprep.subr.mxu0 0.0
    %120 = vmatpush1.msra.mxu0 0.0
    %121 = vmatprep.subr.mxu0 0.0
    %122 = vmatpush1.msra.mxu0 0.0
    %123 = vmatprep.subr.mxu0 0.0
    %124 = vmatpush1.msra.mxu0 0.0
    %125 = vmatprep.subr.mxu0 0.0
    %126 = vmatpush1.msra.mxu0 0.0
    %127 = vmatprep.mubr.f32.mxu0 0.0
    %128 = vmatmul.mubr.f32.gmra.mrb[0].mxu0 %v58
    %v129 = vpop.f32.mrb[0].mxu0
    %v130 = vadd.f32 %v55, %v129
    %v131 = vpop.f32.mrb[0].mxu0
    %132 = vmatprep.mubr.f32.mxu0 0.0
    %133 = vmatmul.mubr.f32.gmra.mrb[0].mxu0 %v61
    %v134 = vpop.f32.mrb[0].mxu0
    %v135 = vadd.f32 %v55, %v134
    %v136 = vpop.f32.mrb[0].mxu0
    %137 = vdwg.mxu0
    %v138 = vld [vmem:[%s3] sm:$0xff]
    %v139 = vld [vmem:[%s3 + $0x8] sm:$0xff]
    %v140 = vld [vmem:[%s3 + $0x10] sm:$0xff]
    %v141 = vld [vmem:[%s3 + $0x18] sm:$0xff]
    %v142 = vlaneseq
    %v143 = vshrl.u32 %v142, 7
    %v144 = vsub.s32 0, %v143
    %v145 = vrot.slane %v30, %v144
    %vm146 = vcmask 261120
    %v148 = vsel %vm146, %v130, 0
    %v151 = vsel %vm146, %v135, 0
    %153 = vmatprep.subr.mxu0 0.0
    %154 = vmatpush1.msra.mxu0 %v138
    %155 = vmatprep.subr.mxu0 0.0
    %156 = vmatpush1.msra.mxu0 %v139
    %157 = vmatprep.subr.mxu0 0.0
    %158 = vmatpush1.msra.mxu0 %v140
    %159 = vmatprep.subr.mxu0 0.0
    %160 = vmatpush1.msra.mxu0 %v141
    %161 = vmatprep.subr.mxu0 0.0
    %162 = vmatpush1.msra.mxu0 0.0
    %163 = vmatprep.subr.mxu0 0.0
    %164 = vmatpush1.msra.mxu0 0.0
    %165 = vmatprep.subr.mxu0 0.0
    %166 = vmatpush1.msra.mxu0 0.0
    %167 = vmatprep.subr.mxu0 0.0
    %168 = vmatpush1.msra.mxu0 0.0
    %169 = vmatprep.subr.mxu0 0.0
    %170 = vmatpush1.msra.mxu0 0.0
    %171 = vmatprep.subr.mxu0 0.0
    %172 = vmatpush1.msra.mxu0 0.0
    %173 = vmatprep.subr.mxu0 0.0
    %174 = vmatpush1.msra.mxu0 0.0
    %175 = vmatprep.subr.mxu0 0.0
    %176 = vmatpush1.msra.mxu0 0.0
    %177 = vmatprep.subr.mxu0 0.0
    %178 = vmatpush1.msra.mxu0 0.0
    %179 = vmatprep.subr.mxu0 0.0
    %180 = vmatpush1.msra.mxu0 0.0
    %181 = vmatprep.subr.mxu0 0.0
    %182 = vmatpush1.msra.mxu0 0.0
    %183 = vmatprep.subr.mxu0 0.0
    %184 = vmatpush1.msra.mxu0 0.0
    %185 = vmatprep.subr.mxu0 0.0
    %186 = vmatpush1.msra.mxu0 0.0
    %187 = vmatprep.subr.mxu0 0.0
    %188 = vmatpush1.msra.mxu0 0.0
    %189 = vmatprep.subr.mxu0 0.0
    %190 = vmatpush1.msra.mxu0 0.0
    %191 = vmatprep.subr.mxu0 0.0
    %192 = vmatpush1.msra.mxu0 0.0
    %193 = vmatprep.subr.mxu0 0.0
    %194 = vmatpush1.msra.mxu0 0.0
    %195 = vmatprep.subr.mxu0 0.0
    %196 = vmatpush1.msra.mxu0 0.0
    %197 = vmatprep.subr.mxu0 0.0
    %198 = vmatpush1.msra.mxu0 0.0
    %199 = vmatprep.subr.mxu0 0.0
    %200 = vmatpush1.msra.mxu0 0.0
    %201 = vmatprep.subr.mxu0 0.0
    %202 = vmatpush1.msra.mxu0 0.0
    %203 = vmatprep.subr.mxu0 0.0
    %204 = vmatpush1.msra.mxu0 0.0
    %205 = vmatprep.subr.mxu0 0.0
    %206 = vmatpush1.msra.mxu0 0.0
    %207 = vmatprep.subr.mxu0 0.0
    %208 = vmatpush1.msra.mxu0 0.0
    %209 = vmatprep.subr.mxu0 0.0
    %210 = vmatpush1.msra.mxu0 0.0
    %211 = vmatprep.subr.mxu0 0.0
    %212 = vmatpush1.msra.mxu0 0.0
    %213 = vmatprep.subr.mxu0 0.0
    %214 = vmatpush1.msra.mxu0 0.0
    %215 = vmatprep.subr.mxu0 0.0
    %216 = vmatpush1.msra.mxu0 0.0
    %217 = vmatprep.mubr.f32.mxu0 0.0
    %218 = vmatmul.mubr.f32.gmra.mrb[0].mxu0 %v148
    %v219 = vpop.f32.mrb[0].mxu0
    %v220 = vadd.f32 %v145, %v219
    %v221 = vpop.f32.mrb[0].mxu0
    %222 = vmatprep.mubr.f32.mxu0 0.0
    %223 = vmatmul.mubr.f32.gmra.mrb[0].mxu0 %v151
    %v224 = vpop.f32.mrb[0].mxu0
    %v225 = vadd.f32 %v145, %v224
    %v226 = vpop.f32.mrb[0].mxu0
    %227 = vdwg.mxu0
    %229 = vrot.lane.b32.xlu0 %v220, 96
    %v230 = vpop.permute.xlu0 %229
    %v231 = vsel %vm146, %v220, 0
    %v233 = vsel %vm146, %v230, 0
    %235 = vmatprep.subr.mxu0 0.0
    %236 = vmatpush1.xpose.msra.mxu0 %v233
    %237 = vmatprep.subr.mxu0 0.0
    %238 = vmatpush1.xpose.msra.mxu0 0.0
    %239 = vmatprep.subr.mxu0 0.0
    %240 = vmatpush1.xpose.msra.mxu0 0.0
    %241 = vmatprep.subr.mxu0 0.0
    %242 = vmatpush1.xpose.msra.mxu0 0.0
    %243 = vmatprep.subr.mxu0 0.0
    %244 = vmatpush1.xpose.msra.mxu0 0.0
    %245 = vmatprep.subr.mxu0 0.0
    %246 = vmatpush1.xpose.msra.mxu0 0.0
    %247 = vmatprep.subr.mxu0 0.0
    %248 = vmatpush1.xpose.msra.mxu0 0.0
    %249 = vmatprep.subr.mxu0 0.0
    %250 = vmatpush1.xpose.msra.mxu0 0.0
    %251 = vmatprep.subr.mxu0 0.0
    %252 = vmatpush1.xpose.msra.mxu0 0.0
    %253 = vmatprep.subr.mxu0 0.0
    %254 = vmatpush1.xpose.msra.mxu0 0.0
    %255 = vmatprep.subr.mxu0 0.0
    %256 = vmatpush1.xpose.msra.mxu0 0.0
    %257 = vmatprep.subr.mxu0 0.0
    %258 = vmatpush1.xpose.msra.mxu0 0.0
    %259 = vmatprep.subr.mxu0 0.0
    %260 = vmatpush1.xpose.msra.mxu0 0.0
    %261 = vmatprep.subr.mxu0 0.0
    %262 = vmatpush1.xpose.msra.mxu0 0.0
    %263 = vmatprep.subr.mxu0 0.0
    %264 = vmatpush1.xpose.msra.mxu0 0.0
    %265 = vmatprep.subr.mxu0 0.0
    %266 = vmatpush1.xpose.msra.mxu0 0.0
    %267 = vmatprep.subr.mxu0 0.0
    %268 = vmatpush1.xpose.msra.mxu0 0.0
    %269 = vmatprep.subr.mxu0 0.0
    %270 = vmatpush1.xpose.msra.mxu0 0.0
    %271 = vmatprep.subr.mxu0 0.0
    %272 = vmatpush1.xpose.msra.mxu0 0.0
    %273 = vmatprep.subr.mxu0 0.0
    %274 = vmatpush1.xpose.msra.mxu0 0.0
    %275 = vmatprep.subr.mxu0 0.0
    %276 = vmatpush1.xpose.msra.mxu0 0.0
    %277 = vmatprep.subr.mxu0 0.0
    %278 = vmatpush1.xpose.msra.mxu0 0.0
    %279 = vmatprep.subr.mxu0 0.0
    %280 = vmatpush1.xpose.msra.mxu0 0.0
    %281 = vmatprep.subr.mxu0 0.0
    %282 = vmatpush1.xpose.msra.mxu0 0.0
    %283 = vmatprep.subr.mxu0 0.0
    %284 = vmatpush1.xpose.msra.mxu0 0.0
    %285 = vmatprep.subr.mxu0 0.0
    %286 = vmatpush1.xpose.msra.mxu0 0.0
    %287 = vmatprep.subr.mxu0 0.0
    %288 = vmatpush1.xpose.msra.mxu0 0.0
    %289 = vmatprep.subr.mxu0 0.0
    %290 = vmatpush1.xpose.msra.mxu0 0.0
    %291 = vmatprep.subr.mxu0 0.0
    %292 = vmatpush1.xpose.msra.mxu0 0.0
    %293 = vmatprep.subr.mxu0 0.0
    %294 = vmatpush1.xpose.msra.mxu0 0.0
    %295 = vmatprep.subr.mxu0 0.0
    %296 = vmatpush1.xpose.msra.mxu0 0.0
    %297 = vmatprep.subr.mxu0 0.0
    %298 = vmatpush1.xpose.msra.mxu0 0.0
    %299 = vmatprep.mubr.f32.mxu0 0.0
    %300 = vmatmul.mubr.f32.gmra.mrb[0].mxu0 %v231
    %v301 = vpop.f32.mrb[0].mxu0
    %v302 = vadd.f32 0.0, %v301
    %v303 = vpop.f32.mrb[0].mxu0
    %304 = vdwg.mxu0
    %v305 = vmul.f32 %v302, 0.17677669
    %vm306 = vcmask 64512
    %v307 = vsel %vm306, %v305, -inf
    %308 = vmax.xlane.f32.xlu0 %v307
    %v309 = vpop.xlane.xlu0 %308
    %v310 = vsub.f32 %v305, %v309
    %v311 = vmul.f32 %v310, 1.442695
    %v312 = vpow.pop %v311
    %v313 = vsel %vm306, %v312, 0.0
    %314 = vadd.xlane.f32.xlu0 %v313
    %v315 = vpop.xlane.xlu0 %314
    %v316 = vrcp.pop %v315
    %v317 = vmul.f32 %v312, %v316
    %318 = vrot.lane.b32.xlu0 %v220, 64
    %v319 = vpop.permute.xlu0 %318
    %v322 = vsel %vm306, %v317, 0
    %324 = vmatprep.subr.mxu0 0.0
    %325 = vmatpush1.msra.mxu0 %v319
    %326 = vmatprep.subr.mxu0 0.0
    %327 = vmatpush1.msra.mxu0 0.0
    %328 = vmatprep.subr.mxu0 0.0
    %329 = vmatpush1.msra.mxu0 0.0
    %330 = vmatprep.subr.mxu0 0.0
    %331 = vmatpush1.msra.mxu0 0.0
    %332 = vmatprep.subr.mxu0 0.0
    %333 = vmatpush1.msra.mxu0 0.0
    %334 = vmatprep.subr.mxu0 0.0
    %335 = vmatpush1.msra.mxu0 0.0
    %336 = vmatprep.subr.mxu0 0.0
    %337 = vmatpush1.msra.mxu0 0.0
    %338 = vmatprep.subr.mxu0 0.0
    %339 = vmatpush1.msra.mxu0 0.0
    %340 = vmatprep.subr.mxu0 0.0
    %341 = vmatpush1.msra.mxu0 0.0
    %342 = vmatprep.subr.mxu0 0.0
    %343 = vmatpush1.msra.mxu0 0.0
    %344 = vmatprep.subr.mxu0 0.0
    %345 = vmatpush1.msra.mxu0 0.0
    %346 = vmatprep.subr.mxu0 0.0
    %347 = vmatpush1.msra.mxu0 0.0
    %348 = vmatprep.subr.mxu0 0.0
    %349 = vmatpush1.msra.mxu0 0.0
    %350 = vmatprep.subr.mxu0 0.0
    %351 = vmatpush1.msra.mxu0 0.0
    %352 = vmatprep.subr.mxu0 0.0
    %353 = vmatpush1.msra.mxu0 0.0
    %354 = vmatprep.subr.mxu0 0.0
    %355 = vmatpush1.msra.mxu0 0.0
    %356 = vmatprep.subr.mxu0 0.0
    %357 = vmatpush1.msra.mxu0 0.0
    %358 = vmatprep.subr.mxu0 0.0
    %359 = vmatpush1.msra.mxu0 0.0
    %360 = vmatprep.subr.mxu0 0.0
    %361 = vmatpush1.msra.mxu0 0.0
    %362 = vmatprep.subr.mxu0 0.0
    %363 = vmatpush1.msra.mxu0 0.0
    %364 = vmatprep.subr.mxu0 0.0
    %365 = vmatpush1.msra.mxu0 0.0
    %366 = vmatprep.subr.mxu0 0.0
    %367 = vmatpush1.msra.mxu0 0.0
    %368 = vmatprep.subr.mxu0 0.0
    %369 = vmatpush1.msra.mxu0 0.0
    %370 = vmatprep.subr.mxu0 0.0
    %371 = vmatpush1.msra.mxu0 0.0
    %372 = vmatprep.subr.mxu0 0.0
    %373 = vmatpush1.msra.mxu0 0.0
    %374 = vmatprep.subr.mxu0 0.0
    %375 = vmatpush1.msra.mxu0 0.0
    %376 = vmatprep.subr.mxu0 0.0
    %377 = vmatpush1.msra.mxu0 0.0
    %378 = vmatprep.subr.mxu0 0.0
    %379 = vmatpush1.msra.mxu0 0.0
    %380 = vmatprep.subr.mxu0 0.0
    %381 = vmatpush1.msra.mxu0 0.0
    %382 = vmatprep.subr.mxu0 0.0
    %383 = vmatpush1.msra.mxu0 0.0
    %384 = vmatprep.subr.mxu0 0.0
    %385 = vmatpush1.msra.mxu0 0.0
    %386 = vmatprep.subr.mxu0 0.0
    %387 = vmatpush1.msra.mxu0 0.0
    %388 = vmatprep.mubr.f32.mxu0 0.0
    %389 = vmatmul.mubr.f32.gmra.mrb[0].mxu0 %v322
    %v390 = vpop.f32.mrb[0].mxu0
    %v391 = vadd.f32 0.0, %v390
    %v392 = vpop.f32.mrb[0].mxu0
    %393 = vdwg.mxu0
    %395 = vrot.lane.b32.xlu0 %v225, 96
    %v396 = vpop.permute.xlu0 %395
    %v397 = vsel %vm146, %v225, 0
    %v399 = vsel %vm146, %v396, 0
    %401 = vmatprep.subr.mxu0 0.0
    %402 = vmatpush1.xpose.msra.mxu0 %v399
    %403 = vmatprep.subr.mxu0 0.0
    %404 = vmatpush1.xpose.msra.mxu0 0.0
    %405 = vmatprep.subr.mxu0 0.0
    %406 = vmatpush1.xpose.msra.mxu0 0.0
    %407 = vmatprep.subr.mxu0 0.0
    %408 = vmatpush1.xpose.msra.mxu0 0.0
    %409 = vmatprep.subr.mxu0 0.0
    %410 = vmatpush1.xpose.msra.mxu0 0.0
    %411 = vmatprep.subr.mxu0 0.0
    %412 = vmatpush1.xpose.msra.mxu0 0.0
    %413 = vmatprep.subr.mxu0 0.0
    %414 = vmatpush1.xpose.msra.mxu0 0.0
    %415 = vmatprep.subr.mxu0 0.0
    %416 = vmatpush1.xpose.msra.mxu0 0.0
    %417 = vmatprep.subr.mxu0 0.0
    %418 = vmatpush1.xpose.msra.mxu0 0.0
    %419 = vmatprep.subr.mxu0 0.0
    %420 = vmatpush1.xpose.msra.mxu0 0.0
    %421 = vmatprep.subr.mxu0 0.0
    %422 = vmatpush1.xpose.msra.mxu0 0.0
    %423 = vmatprep.subr.mxu0 0.0
    %424 = vmatpush1.xpose.msra.mxu0 0.0
    %425 = vmatprep.subr.mxu0 0.0
    %426 = vmatpush1.xpose.msra.mxu0 0.0
    %427 = vmatprep.subr.mxu0 0.0
    %428 = vmatpush1.xpose.msra.mxu0 0.0
    %429 = vmatprep.subr.mxu0 0.0
    %430 = vmatpush1.xpose.msra.mxu0 0.0
    %431 = vmatprep.subr.mxu0 0.0
    %432 = vmatpush1.xpose.msra.mxu0 0.0
    %433 = vmatprep.subr.mxu0 0.0
    %434 = vmatpush1.xpose.msra.mxu0 0.0
    %435 = vmatprep.subr.mxu0 0.0
    %436 = vmatpush1.xpose.msra.mxu0 0.0
    %437 = vmatprep.subr.mxu0 0.0
    %438 = vmatpush1.xpose.msra.mxu0 0.0
    %439 = vmatprep.subr.mxu0 0.0
    %440 = vmatpush1.xpose.msra.mxu0 0.0
    %441 = vmatprep.subr.mxu0 0.0
    %442 = vmatpush1.xpose.msra.mxu0 0.0
    %443 = vmatprep.subr.mxu0 0.0
    %444 = vmatpush1.xpose.msra.mxu0 0.0
    %445 = vmatprep.subr.mxu0 0.0
    %446 = vmatpush1.xpose.msra.mxu0 0.0
    %447 = vmatprep.subr.mxu0 0.0
    %448 = vmatpush1.xpose.msra.mxu0 0.0
    %449 = vmatprep.subr.mxu0 0.0
    %450 = vmatpush1.xpose.msra.mxu0 0.0
    %451 = vmatprep.subr.mxu0 0.0
    %452 = vmatpush1.xpose.msra.mxu0 0.0
    %453 = vmatprep.subr.mxu0 0.0
    %454 = vmatpush1.xpose.msra.mxu0 0.0
    %455 = vmatprep.subr.mxu0 0.0
    %456 = vmatpush1.xpose.msra.mxu0 0.0
    %457 = vmatprep.subr.mxu0 0.0
    %458 = vmatpush1.xpose.msra.mxu0 0.0
    %459 = vmatprep.subr.mxu0 0.0
    %460 = vmatpush1.xpose.msra.mxu0 0.0
    %461 = vmatprep.subr.mxu0 0.0
    %462 = vmatpush1.xpose.msra.mxu0 0.0
    %463 = vmatprep.subr.mxu0 0.0
    %464 = vmatpush1.xpose.msra.mxu0 0.0
    %465 = vmatprep.mubr.f32.mxu0 0.0
    %466 = vmatmul.mubr.f32.gmra.mrb[0].mxu0 %v397
    %v467 = vpop.f32.mrb[0].mxu0
    %v468 = vadd.f32 0.0, %v467
    %v469 = vpop.f32.mrb[0].mxu0
    %470 = vdwg.mxu0
    %v471 = vmul.f32 %v468, 0.17677669
    %v472 = vsel %vm306, %v471, -inf
    %473 = vmax.xlane.f32.xlu0 %v472
    %v474 = vpop.xlane.xlu0 %473
    %v475 = vsub.f32 %v471, %v474
    %v476 = vmul.f32 %v475, 1.442695
    %v477 = vpow.pop %v476
    %v478 = vsel %vm306, %v477, 0.0
    %479 = vadd.xlane.f32.xlu0 %v478
    %v480 = vpop.xlane.xlu0 %479
    %v481 = vrcp.pop %v480
    %v482 = vmul.f32 %v477, %v481
    %483 = vrot.lane.b32.xlu0 %v225, 64
    %v484 = vpop.permute.xlu0 %483
    %v487 = vsel %vm306, %v482, 0
    %489 = vmatprep.subr.mxu0 0.0
    %490 = vmatpush1.msra.mxu0 %v484
    %491 = vmatprep.subr.mxu0 0.0
    %492 = vmatpush1.msra.mxu0 0.0
    %493 = vmatprep.subr.mxu0 0.0
    %494 = vmatpush1.msra.mxu0 0.0
    %495 = vmatprep.subr.mxu0 0.0
    %496 = vmatpush1.msra.mxu0 0.0
    %497 = vmatprep.subr.mxu0 0.0
    %498 = vmatpush1.msra.mxu0 0.0
    %499 = vmatprep.subr.mxu0 0.0
    %500 = vmatpush1.msra.mxu0 0.0
    %501 = vmatprep.subr.mxu0 0.0
    %502 = vmatpush1.msra.mxu0 0.0
    %503 = vmatprep.subr.mxu0 0.0
    %504 = vmatpush1.msra.mxu0 0.0
    %505 = vmatprep.subr.mxu0 0.0
    %506 = vmatpush1.msra.mxu0 0.0
    %507 = vmatprep.subr.mxu0 0.0
    %508 = vmatpush1.msra.mxu0 0.0
    %509 = vmatprep.subr.mxu0 0.0
    %510 = vmatpush1.msra.mxu0 0.0
    %511 = vmatprep.subr.mxu0 0.0
    %512 = vmatpush1.msra.mxu0 0.0
    %513 = vmatprep.subr.mxu0 0.0
    %514 = vmatpush1.msra.mxu0 0.0
    %515 = vmatprep.subr.mxu0 0.0
    %516 = vmatpush1.msra.mxu0 0.0
    %517 = vmatprep.subr.mxu0 0.0
    %518 = vmatpush1.msra.mxu0 0.0
    %519 = vmatprep.subr.mxu0 0.0
    %520 = vmatpush1.msra.mxu0 0.0
    %521 = vmatprep.subr.mxu0 0.0
    %522 = vmatpush1.msra.mxu0 0.0
    %523 = vmatprep.subr.mxu0 0.0
    %524 = vmatpush1.msra.mxu0 0.0
    %525 = vmatprep.subr.mxu0 0.0
    %526 = vmatpush1.msra.mxu0 0.0
    %527 = vmatprep.subr.mxu0 0.0
    %528 = vmatpush1.msra.mxu0 0.0
    %529 = vmatprep.subr.mxu0 0.0
    %530 = vmatpush1.msra.mxu0 0.0
    %531 = vmatprep.subr.mxu0 0.0
    %532 = vmatpush1.msra.mxu0 0.0
    %533 = vmatprep.subr.mxu0 0.0
    %534 = vmatpush1.msra.mxu0 0.0
    %535 = vmatprep.subr.mxu0 0.0
    %536 = vmatpush1.msra.mxu0 0.0
    %537 = vmatprep.subr.mxu0 0.0
    %538 = vmatpush1.msra.mxu0 0.0
    %539 = vmatprep.subr.mxu0 0.0
    %540 = vmatpush1.msra.mxu0 0.0
    %541 = vmatprep.subr.mxu0 0.0
    %542 = vmatpush1.msra.mxu0 0.0
    %543 = vmatprep.subr.mxu0 0.0
    %544 = vmatpush1.msra.mxu0 0.0
    %545 = vmatprep.subr.mxu0 0.0
    %546 = vmatpush1.msra.mxu0 0.0
    %547 = vmatprep.subr.mxu0 0.0
    %548 = vmatpush1.msra.mxu0 0.0
    %549 = vmatprep.subr.mxu0 0.0
    %550 = vmatpush1.msra.mxu0 0.0
    %551 = vmatprep.subr.mxu0 0.0
    %552 = vmatpush1.msra.mxu0 0.0
    %553 = vmatprep.mubr.f32.mxu0 0.0
    %554 = vmatmul.mubr.f32.gmra.mrb[0].mxu0 %v487
    %v555 = vpop.f32.mrb[0].mxu0
    %v556 = vadd.f32 0.0, %v555
    %v557 = vpop.f32.mrb[0].mxu0
    %558 = vdwg.mxu0
    %v559 = vld [vmem:[%s4] sm:$0xff]
    %v560 = vld [vmem:[%s4 + $0x8] sm:$0xff]
    %v561 = vld [vmem:[%s4 + $0x10] sm:$0xff]
    %v562 = vld [vmem:[%s4 + $0x18] sm:$0xff]
    %v563 = vlaneseq
    %v564 = vshrl.u32 %v563, 7
    %v565 = vsub.s32 2, %v564
    %v566 = vrot.slane %v30, %v565
    %v568 = vsel %vm146, %v391, 0
    %v571 = vsel %vm146, %v556, 0
    %573 = vmatprep.subr.mxu0 0.0
    %574 = vmatpush1.msra.mxu0 %v559
    %575 = vmatprep.subr.mxu0 0.0
    %576 = vmatpush1.msra.mxu0 %v560
    %577 = vmatprep.subr.mxu0 0.0
    %578 = vmatpush1.msra.mxu0 %v561
    %579 = vmatprep.subr.mxu0 0.0
    %580 = vmatpush1.msra.mxu0 %v562
    %581 = vmatprep.subr.mxu0 0.0
    %582 = vmatpush1.msra.mxu0 0.0
    %583 = vmatprep.subr.mxu0 0.0
    %584 = vmatpush1.msra.mxu0 0.0
    %585 = vmatprep.subr.mxu0 0.0
    %586 = vmatpush1.msra.mxu0 0.0
    %587 = vmatprep.subr.mxu0 0.0
    %588 = vmatpush1.msra.mxu0 0.0
    %589 = vmatprep.subr.mxu0 0.0
    %590 = vmatpush1.msra.mxu0 0.0
    %591 = vmatprep.subr.mxu0 0.0
    %592 = vmatpush1.msra.mxu0 0.0
    %593 = vmatprep.subr.mxu0 0.0
    %594 = vmatpush1.msra.mxu0 0.0
    %595 = vmatprep.subr.mxu0 0.0
    %596 = vmatpush1.msra.mxu0 0.0
    %597 = vmatprep.subr.mxu0 0.0
    %598 = vmatpush1.msra.mxu0 0.0
    %599 = vmatprep.subr.mxu0 0.0
    %600 = vmatpush1.msra.mxu0 0.0
    %601 = vmatprep.subr.mxu0 0.0
    %602 = vmatpush1.msra.mxu0 0.0
    %603 = vmatprep.subr.mxu0 0.0
    %604 = vmatpush1.msra.mxu0 0.0
    %605 = vmatprep.subr.mxu0 0.0
    %606 = vmatpush1.msra.mxu0 0.0
    %607 = vmatprep.subr.mxu0 0.0
    %608 = vmatpush1.msra.mxu0 0.0
    %609 = vmatprep.subr.mxu0 0.0
    %610 = vmatpush1.msra.mxu0 0.0
    %611 = vmatprep.subr.mxu0 0.0
    %612 = vmatpush1.msra.mxu0 0.0
    %613 = vmatprep.subr.mxu0 0.0
    %614 = vmatpush1.msra.mxu0 0.0
    %615 = vmatprep.subr.mxu0 0.0
    %616 = vmatpush1.msra.mxu0 0.0
    %617 = vmatprep.subr.mxu0 0.0
    %618 = vmatpush1.msra.mxu0 0.0
    %619 = vmatprep.subr.mxu0 0.0
    %620 = vmatpush1.msra.mxu0 0.0
    %621 = vmatprep.subr.mxu0 0.0
    %622 = vmatpush1.msra.mxu0 0.0
    %623 = vmatprep.subr.mxu0 0.0
    %624 = vmatpush1.msra.mxu0 0.0
    %625 = vmatprep.subr.mxu0 0.0
    %626 = vmatpush1.msra.mxu0 0.0
    %627 = vmatprep.subr.mxu0 0.0
    %628 = vmatpush1.msra.mxu0 0.0
    %629 = vmatprep.subr.mxu0 0.0
    %630 = vmatpush1.msra.mxu0 0.0
    %631 = vmatprep.subr.mxu0 0.0
    %632 = vmatpush1.msra.mxu0 0.0
    %633 = vmatprep.subr.mxu0 0.0
    %634 = vmatpush1.msra.mxu0 0.0
    %635 = vmatprep.subr.mxu0 0.0
    %636 = vmatpush1.msra.mxu0 0.0
    %637 = vmatprep.mubr.f32.mxu0 0.0
    %638 = vmatmul.mubr.f32.gmra.mrb[0].mxu0 %v568
    %v639 = vpop.f32.mrb[0].mxu0
    %v640 = vadd.f32 %v566, %v639
    %v641 = vpop.f32.mrb[0].mxu0
    %642 = vmatprep.mubr.f32.mxu0 0.0
    %643 = vmatmul.mubr.f32.gmra.mrb[0].mxu0 %v571
    %v644 = vpop.f32.mrb[0].mxu0
    %v645 = vadd.f32 %v566, %v644
    %v646 = vpop.f32.mrb[0].mxu0
    %647 = vdwg.mxu0
    %v648 = vadd.f32 %v130, %v640
    %v649 = vadd.f32 %v135, %v645
    %v650 = vsel %vm146, %v648, 0.0
    %651 = vadd.xlane.f32.xlu0 %v650
    %v652 = vpop.xlane.xlu0 %651
    %v653 = vsel %vm146, %v649, 0.0
    %654 = vadd.xlane.f32.xlu0 %v653
    %v655 = vpop.xlane.xlu0 %654
    %v656 = vrcp.pop 32.0
    %v657 = vmul.f32 %v652, %v656
    %v658 = vmul.f32 %v655, %v656
    %v659 = vsub.f32 %v648, %v657
    %v660 = vsub.f32 %v649, %v658
    %v661 = vmul.f32 %v659, %v659
    %v662 = vmul.f32 %v660, %v660
    %v663 = vsel %vm146, %v661, 0.0
    %664 = vadd.xlane.f32.xlu0 %v663
    %v665 = vpop.xlane.xlu0 %664
    %v666 = vsel %vm146, %v662, 0.0
    %667 = vadd.xlane.f32.xlu0 %v666
    %v668 = vpop.xlane.xlu0 %667
    %v669 = vmul.f32 %v665, %v656
    %v670 = vmul.f32 %v668, %v656
    %v671 = vadd.f32 %v669, 1e-05
    %v672 = vadd.f32 %v670, 1e-05
    %v673 = vrsqrt.pop %v671
    %v674 = vrsqrt.pop %v672
    %v675 = vmul.f32 %v659, %v673
    %v676 = vmul.f32 %v660, %v674
    %v677 = vlaneseq
    %v678 = vshrl.u32 %v677, 7
    %v679 = vsub.s32 4, %v678
    %v680 = vrot.slane %v30, %v679
    %v681 = vmul.f32 %v675, %v680
    %v682 = vmul.f32 %v676, %v680
    %v683 = vlaneseq
    %v684 = vshrl.u32 %v683, 7
    %v685 = vsub.s32 5, %v684
    %v686 = vrot.slane %v30, %v685
    %v687 = vadd.f32 %v681, %v686
    %v688 = vadd.f32 %v682, %v686
    %v689 = vld [vmem:[%s5] sm:$0xff]
    %v690 = vld [vmem:[%s5 + $0x8] sm:$0xff]
    %v691 = vld [vmem:[%s5 + $0x10] sm:$0xff]
    %v692 = vld [vmem:[%s5 + $0x18] sm:$0xff]
    %v693 = vlaneseq
    %v694 = vshrl.u32 %v693, 7
    %v695 = vsub.s32 1, %v694
    %v696 = vrot.slane %v30, %v695
    %v698 = vsel %vm146, %v687, 0
    %v701 = vsel %vm146, %v688, 0
    %703 = vmatprep.subr.mxu0 0.0
    %704 = vmatpush1.msra.mxu0 %v689
    %705 = vmatprep.subr.mxu0 0.0
    %706 = vmatpush1.msra.mxu0 %v690
    %707 = vmatprep.subr.mxu0 0.0
    %708 = vmatpush1.msra.mxu0 %v691
    %709 = vmatprep.subr.mxu0 0.0
    %710 = vmatpush1.msra.mxu0 %v692
    %711 = vmatprep.subr.mxu0 0.0
    %712 = vmatpush1.msra.mxu0 0.0
    %713 = vmatprep.subr.mxu0 0.0
    %714 = vmatpush1.msra.mxu0 0.0
    %715 = vmatprep.subr.mxu0 0.0
    %716 = vmatpush1.msra.mxu0 0.0
    %717 = vmatprep.subr.mxu0 0.0
    %718 = vmatpush1.msra.mxu0 0.0
    %719 = vmatprep.subr.mxu0 0.0
    %720 = vmatpush1.msra.mxu0 0.0
    %721 = vmatprep.subr.mxu0 0.0
    %722 = vmatpush1.msra.mxu0 0.0
    %723 = vmatprep.subr.mxu0 0.0
    %724 = vmatpush1.msra.mxu0 0.0
    %725 = vmatprep.subr.mxu0 0.0
    %726 = vmatpush1.msra.mxu0 0.0
    %727 = vmatprep.subr.mxu0 0.0
    %728 = vmatpush1.msra.mxu0 0.0
    %729 = vmatprep.subr.mxu0 0.0
    %730 = vmatpush1.msra.mxu0 0.0
    %731 = vmatprep.subr.mxu0 0.0
    %732 = vmatpush1.msra.mxu0 0.0
    %733 = vmatprep.subr.mxu0 0.0
    %734 = vmatpush1.msra.mxu0 0.0
    %735 = vmatprep.subr.mxu0 0.0
    %736 = vmatpush1.msra.mxu0 0.0
    %737 = vmatprep.subr.mxu0 0.0
    %738 = vmatpush1.msra.mxu0 0.0
    %739 = vmatprep.subr.mxu0 0.0
    %740 = vmatpush1.msra.mxu0 0.0
    %741 = vmatprep.subr.mxu0 0.0
    %742 = vmatpush1.msra.mxu0 0.0
    %743 = vmatprep.subr.mxu0 0.0
    %744 = vmatpush1.msra.mxu0 0.0
    %745 = vmatprep.subr.mxu0 0.0
    %746 = vmatpush1.msra.mxu0 0.0
    %747 = vmatprep.subr.mxu0 0.0
    %748 = vmatpush1.msra.mxu0 0.0
    %749 = vmatprep.subr.mxu0 0.0
    %750 = vmatpush1.msra.mxu0 0.0
    %751 = vmatprep.subr.mxu0 0.0
    %752 = vmatpush1.msra.mxu0 0.0
    %753 = vmatprep.subr.mxu0 0.0
    %754 = vmatpush1.msra.mxu0 0.0
    %755 = vmatprep.subr.mxu0 0.0
    %756 = vmatpush1.msra.mxu0 0.0
    %757 = vmatprep.subr.mxu0 0.0
    %758 = vmatpush1.msra.mxu0 0.0
    %759 = vmatprep.subr.mxu0 0.0
    %760 = vmatpush1.msra.mxu0 0.0
    %761 = vmatprep.subr.mxu0 0.0
    %762 = vmatpush1.msra.mxu0 0.0
    %763 = vmatprep.subr.mxu0 0.0
    %764 = vmatpush1.msra.mxu0 0.0
    %765 = vmatprep.subr.mxu0 0.0
    %766 = vmatpush1.msra.mxu0 0.0
    %767 = vmatprep.mubr.f32.mxu0 0.0
    %768 = vmatmul.mubr.f32.gmra.mrb[0].mxu0 %v698
    %v769 = vpop.f32.mrb[0].mxu0
    %v770 = vadd.f32 %v696, %v769
    %v771 = vpop.f32.mrb[0].mxu0
    %772 = vmatprep.mubr.f32.mxu0 0.0
    %773 = vmatmul.mubr.f32.gmra.mrb[0].mxu0 %v701
    %v774 = vpop.f32.mrb[0].mxu0
    %v775 = vadd.f32 %v696, %v774
    %v776 = vpop.f32.mrb[0].mxu0
    %777 = vdwg.mxu0
    %v778 = vmul.f32 %v770, 0.5
    %v779 = vmul.f32 %v775, 0.5
    %v780 = vmul.f32 %v770, 0.044715
    %v781 = vmul.f32 %v775, 0.044715
    %v782 = vmul.f32 %v780, %v770
    %v783 = vmul.f32 %v781, %v775
    %v784 = vmul.f32 %v782, %v770
    %v785 = vmul.f32 %v783, %v775
    %v786 = vadd.f32 %v770, %v784
    %v787 = vadd.f32 %v775, %v785
    %v788 = vmul.f32 %v786, 0.7978846
    %v789 = vmul.f32 %v787, 0.7978846
    %v790 = vtanh.pop %v788
    %v791 = vtanh.pop %v789
    %v792 = vadd.f32 %v790, 1.0
    %v793 = vadd.f32 %v791, 1.0
    %v794 = vmul.f32 %v778, %v792
    %v795 = vmul.f32 %v779, %v793
    %v796 = vld [vmem:[%s6] sm:$0xff]
    %v797 = vld [vmem:[%s6 + $0x8] sm:$0xff]
    %v798 = vld [vmem:[%s6 + $0x10] sm:$0xff]
    %v799 = vld [vmem:[%s6 + $0x18] sm:$0xff]
    %v800 = vld [vmem:[%s6 + $0x20] sm:$0xff]
    %v801 = vld [vmem:[%s6 + $0x28] sm:$0xff]
    %v802 = vld [vmem:[%s6 + $0x30] sm:$0xff]
    %v803 = vld [vmem:[%s6 + $0x38] sm:$0xff]
    %v804 = vlaneseq
    %v805 = vshrl.u32 %v804, 7
    %v806 = vsub.s32 3, %v805
    %v807 = vrot.slane %v30, %v806
    %v809 = vsel %vm56, %v794, 0
    %v812 = vsel %vm56, %v795, 0
    %814 = vmatprep.subr.mxu0 0.0
    %815 = vmatpush1.msra.mxu0 %v796
    %816 = vmatprep.subr.mxu0 0.0
    %817 = vmatpush1.msra.mxu0 %v797
    %818 = vmatprep.subr.mxu0 0.0
    %819 = vmatpush1.msra.mxu0 %v798
    %820 = vmatprep.subr.mxu0 0.0
    %821 = vmatpush1.msra.mxu0 %v799
    %822 = vmatprep.subr.mxu0 0.0
    %823 = vmatpush1.msra.mxu0 %v800
    %824 = vmatprep.subr.mxu0 0.0
    %825 = vmatpush1.msra.mxu0 %v801
    %826 = vmatprep.subr.mxu0 0.0
    %827 = vmatpush1.msra.mxu0 %v802
    %828 = vmatprep.subr.mxu0 0.0
    %829 = vmatpush1.msra.mxu0 %v803
    %830 = vmatprep.subr.mxu0 0.0
    %831 = vmatpush1.msra.mxu0 0.0
    %832 = vmatprep.subr.mxu0 0.0
    %833 = vmatpush1.msra.mxu0 0.0
    %834 = vmatprep.subr.mxu0 0.0
    %835 = vmatpush1.msra.mxu0 0.0
    %836 = vmatprep.subr.mxu0 0.0
    %837 = vmatpush1.msra.mxu0 0.0
    %838 = vmatprep.subr.mxu0 0.0
    %839 = vmatpush1.msra.mxu0 0.0
    %840 = vmatprep.subr.mxu0 0.0
    %841 = vmatpush1.msra.mxu0 0.0
    %842 = vmatprep.subr.mxu0 0.0
    %843 = vmatpush1.msra.mxu0 0.0
    %844 = vmatprep.subr.mxu0 0.0
    %845 = vmatpush1.msra.mxu0 0.0
    %846 = vmatprep.subr.mxu0 0.0
    %847 = vmatpush1.msra.mxu0 0.0
    %848 = vmatprep.subr.mxu0 0.0
    %849 = vmatpush1.msra.mxu0 0.0
    %850 = vmatprep.subr.mxu0 0.0
    %851 = vmatpush1.msra.mxu0 0.0
    %852 = vmatprep.subr.mxu0 0.0
    %853 = vmatpush1.msra.mxu0 0.0
    %854 = vmatprep.subr.mxu0 0.0
    %855 = vmatpush1.msra.mxu0 0.0
    %856 = vmatprep.subr.mxu0 0.0
    %857 = vmatpush1.msra.mxu0 0.0
    %858 = vmatprep.subr.mxu0 0.0
    %859 = vmatpush1.msra.mxu0 0.0
    %860 = vmatprep.subr.mxu0 0.0
    %861 = vmatpush1.msra.mxu0 0.0
    %862 = vmatprep.subr.mxu0 0.0
    %863 = vmatpush1.msra.mxu0 0.0
    %864 = vmatprep.subr.mxu0 0.0
    %865 = vmatpush1.msra.mxu0 0.0
    %866 = vmatprep.subr.mxu0 0.0
    %867 = vmatpush1.msra.mxu0 0.0
    %868 = vmatprep.subr.mxu0 0.0
    %869 = vmatpush1.msra.mxu0 0.0
    %870 = vmatprep.subr.mxu0 0.0
    %871 = vmatpush1.msra.mxu0 0.0
    %872 = vmatprep.subr.mxu0 0.0
    %873 = vmatpush1.msra.mxu0 0.0
    %874 = vmatprep.subr.mxu0 0.0
    %875 = vmatpush1.msra.mxu0 0.0
    %876 = vmatprep.subr.mxu0 0.0
    %877 = vmatpush1.msra.mxu0 0.0
    %878 = vmatprep.mubr.f32.mxu0 0.0
    %879 = vmatmul.mubr.f32.gmra.mrb[0].mxu0 %v809
    %v880 = vpop.f32.mrb[0].mxu0
    %v881 = vadd.f32 %v807, %v880
    %v882 = vpop.f32.mrb[0].mxu0
    %883 = vmatprep.mubr.f32.mxu0 0.0
    %884 = vmatmul.mubr.f32.gmra.mrb[0].mxu0 %v812
    %v885 = vpop.f32.mrb[0].mxu0
    %v886 = vadd.f32 %v807, %v885
    %v887 = vpop.f32.mrb[0].mxu0
    %888 = vdwg.mxu0
    %v889 = vadd.f32 %v687, %v881
    %v890 = vadd.f32 %v688, %v886
    %v891 = vsel %vm146, %v889, 0.0
    %892 = vadd.xlane.f32.xlu0 %v891
    %v893 = vpop.xlane.xlu0 %892
    %v894 = vsel %vm146, %v890, 0.0
    %895 = vadd.xlane.f32.xlu0 %v894
    %v896 = vpop.xlane.xlu0 %895
    %v897 = vmul.f32 %v893, %v656
    %v898 = vmul.f32 %v896, %v656
    %v899 = vsub.f32 %v889, %v897
    %v900 = vsub.f32 %v890, %v898
    %v901 = vmul.f32 %v899, %v899
    %v902 = vmul.f32 %v900, %v900
    %v903 = vsel %vm146, %v901, 0.0
    %904 = vadd.xlane.f32.xlu0 %v903
    %v905 = vpop.xlane.xlu0 %904
    %v906 = vsel %vm146, %v902, 0.0
    %907 = vadd.xlane.f32.xlu0 %v906
    %v908 = vpop.xlane.xlu0 %907
    %v909 = vmul.f32 %v905, %v656
    %v910 = vmul.f32 %v908, %v656
    %v911 = vadd.f32 %v909, 1e-05
    %v912 = vadd.f32 %v910, 1e-05
    %v913 = vrsqrt.pop %v911
    %v914 = vrsqrt.pop %v912
    %v915 = vmul.f32 %v899, %v913
    %v916 = vmul.f32 %v900, %v914
    %v917 = vlaneseq
    %v918 = vshrl.u32 %v917, 7
    %v919 = vsub.s32 6, %v918
    %v920 = vrot.slane %v30, %v919
    %v921 = vmul.f32 %v915, %v920
    %v922 = vmul.f32 %v916, %v920
    %v923 = vlaneseq
    %v924 = vshrl.u32 %v923, 7
    %v925 = vsub.s32 7, %v924
    %v926 = vrot.slane %v30, %v925
    %v927 = vadd.f32 %v921, %v926
    %v928 = vadd.f32 %v922, %v926
    %929 = vst.msk [vmem:[#allocation2] sm:$0xff] %vm146, %v927
    %930 = vst.msk [vmem:[#allocation2 + $0x8] sm:$0xff] %vm146, %v928
    // Predicated region
    $region34: #{tpu_custom_call.1} parent=1 // pred_check
      _
    $region35: #{tpu_custom_call.1} parent=1 // pred_check_branch
      %932 = sbr.rel (0) target = $region37
    $region36: #{tpu_custom_call.1} parent=1 // pred_region
      %s934 = ssub.s32 256, 256
      %935 = vsyncadd [#allocation3], %s934
      %s936 = sshll.u32 [#allocation2], 4
      %s937 = int_to_ptr.vmem [resolvable:$true] %s936
      %942 = dma.vmem_to_hbm [thread:$0]  %s937, 256, %s8, [#allocation3], 128, 128, 8
    $region37: #{tpu_custom_call.1} parent=1 // pred_fallthru
      _
    // Predicated region
    $region38: #{tpu_custom_call.1} parent=1 // pred_check
      _
    $region39: #{tpu_custom_call.1} parent=1 // pred_check_branch
      %944 = sbr.rel (0) target = $region41
    $region40: #{tpu_custom_call.1} parent=1 // pred_region
      %945 = dma.done [#allocation3], 256
    $region41: #{tpu_custom_call.1} parent=1 // pred_fallthru
      _
    %946 = vsyncpa [#allocation3], 1

</llo_original>
